<compile_context>
chip_gen: v6e
topology: v6e:2x2x1
jax: 0.10.0
libtpu: 0.0.40
codegen_flags: <defaults>
</compile_context>

<pallas_src>
import math
import jax
import jax.numpy as jnp
from jax.experimental import pallas as pl
from jax.experimental.pallas import tpu as pltpu

LANE = 128
OUT_PAD = 8          # pad the 2 logits to 8 lanes (full-dim block -> legal, 16x fewer bytes than 128)
_NEG_BIG = -1e30     # f32 bias for padded logit lanes: never wins the max, exp() underflows to 0


def _round_up(x, m):
    return ((x + m - 1) // m) * m


def policy_net_kernel(x_ref, w1_ref, b1_ref, w2_ref, b2_ref, o_ref):
    # Cast activations to the MXU dtype in-kernel (x arrives f32 from HBM, 32 B/row).
    x = x_ref[...].astype(w1_ref.dtype)
    # Hidden layer: (TB, 8) @ (8, Hp) -> f32 accumulate; bias + ReLU in f32.
    h = jnp.dot(x, w1_ref[...], preferred_element_type=jnp.float32)
    h = jnp.maximum(h + b1_ref[...], 0.0)
    # Output layer: (TB, Hp) @ (Hp, 8) -> f32 logits; padded lanes get -1e30 bias.
    logits = jnp.dot(h.astype(w2_ref.dtype), w2_ref[...],
                     preferred_element_type=jnp.float32)
    logits = logits + b2_ref[...]
    # Numerically stable log-softmax over the (8-wide) lane axis, all in f32.
    m = jnp.max(logits, axis=-1, keepdims=True)
    z = logits - m
    lse = jnp.log(jnp.sum(jnp.exp(z), axis=-1, keepdims=True))
    o_ref[...] = (z - lse).astype(o_ref.dtype)


def prepare_policy_params(w1, b1, w2, b2, *, mxu_dtype=jnp.bfloat16):
    """Pad + cast the parameters once (call at init / after each param update).

    w1: (8, H), b1: (H,), w2: (H, 2), b2: (2,)  -- (in, out) layout, i.e. PyTorch W.T.
    Returns (params_tuple, out_dim) to feed policy_network_forward_prepared.
    """
    IN, H = w1.shape
    OUT = w2.shape[1]
    Hp = _round_up(H, LANE)
    OUTP = _round_up(OUT, OUT_PAD)

    w1_p = jnp.zeros((IN, Hp), jnp.float32).at[:, :H].set(w1).astype(mxu_dtype)
    b1_p = jnp.zeros((1, Hp), jnp.float32).at[0, :H].set(b1)          # f32 bias
    w2_p = jnp.zeros((Hp, OUTP), jnp.float32).at[:H, :OUT].set(w2).astype(mxu_dtype)
    # NOTE: b2 stays f32 -- -1e30 is not representable in bf16.
    b2_p = jnp.full((1, OUTP), _NEG_BIG, jnp.float32).at[0, :OUT].set(b2)
    return (w1_p, b1_p, w2_p, b2_p), OUT


def policy_network_forward_prepared(x, params, out_dim, *, block_b=1024,
                                    min_grid_steps=2):
    """log_softmax(relu(x @ w1 + b1) @ w2 + b2)  ->  (B, out_dim) f32."""
    w1_p, b1_p, w2_p, b2_p = params
    B, IN = x.shape
    Hp = w1_p.shape[1]
    OUTP = w2_p.shape[1]

    # Batch tile: big (512-1024) for HBM-roofline efficiency, but capped so the
    # grid has at least `min_grid_steps` parallel steps (dual-TC on v7x).
    target_tb = -(-B // max(1, min_grid_steps))      # cdiv(B, min_grid_steps)
    TB = max(8, min(block_b, _round_up(target_tb, 8)))
    Bp = _round_up(B, TB)
    if Bp != B:
        # Only pad when the batch is ragged; x stays f32 (cast happens in-kernel).
        x = jnp.pad(x, ((0, Bp - B), (0, 0)))
    grid = (Bp // TB,)

    cost = pl.CostEstimate(
        flops=2 * Bp * (IN * Hp + Hp * OUTP),
        transcendentals=Bp * (OUTP + 1),             # 8 exps + 1 log per row
        bytes_accessed=(x.size * x.dtype.itemsize
                        + w1_p.size * w1_p.dtype.itemsize
                        + w2_p.size * w2_p.dtype.itemsize
                        + b1_p.size * 4 + b2_p.size * 4
                        + Bp * OUTP * 4),
    )

    out = pl.pallas_call(
        policy_net_kernel,
        out_shape=jax.ShapeDtypeStruct((Bp, OUTP), jnp.float32),
        grid=grid,
        in_specs=[
            pl.BlockSpec((TB, IN), lambda i: (i, 0)),     # x tile (pipelined per block)
            pl.BlockSpec((IN, Hp), lambda i: (0, 0)),     # w1 resident in VMEM
            pl.BlockSpec((1, Hp), lambda i: (0, 0)),      # b1 resident
            pl.BlockSpec((Hp, OUTP), lambda i: (0, 0)),   # w2 resident (8-wide out)
            pl.BlockSpec((1, OUTP), lambda i: (0, 0)),    # b2 resident (padded w/ -1e30)
        ],
        out_specs=pl.BlockSpec((TB, OUTP), lambda i: (i, 0)),
        compiler_params=pltpu.CompilerParams(
            dimension_semantics=("parallel",),            # shards blocks across TCs on v7x
        ),
        cost_estimate=cost,
    )(x, w1_p, b1_p, w2_p, b2_p)

    return out[:B, :out_dim]


def policy_network_forward(x, w1, b1, w2, b2, *, block_b=1024, min_grid_steps=2,
                           mxu_dtype=jnp.bfloat16):
    """Convenience wrapper: pad/cast params then run the Pallas forward."""
    params, out_dim = prepare_policy_params(w1, b1, w2, b2, mxu_dtype=mxu_dtype)
    return policy_network_forward_prepared(x, params, out_dim,
                                           block_b=block_b,
                                           min_grid_steps=min_grid_steps)


def _torch_like_linear_init(key, fan_in, fan_out):
    # PyTorch nn.Linear default: U(-1/sqrt(fan_in), 1/sqrt(fan_in)) for W and b.
    kw, kb = jax.random.split(key)
    bound = 1.0 / math.sqrt(fan_in)
    w = jax.random.uniform(kw, (fan_in, fan_out), jnp.float32, -bound, bound)
    b = jax.random.uniform(kb, (fan_out,), jnp.float32, -bound, bound)
    return w, b


def reference_forward(x, w1, b1, w2, b2):
    h = jnp.maximum(x @ w1 + b1, 0.0)
    logits = h @ w2 + b2
    return jax.nn.log_softmax(logits, axis=-1)


if __name__ == "__main__":
    key = jax.random.PRNGKey(0)
    k_x, k_l1, k_l2 = jax.random.split(key, 3)

    B = 64          # small batch
    IN = 8          # input features (fixed by module)
    H = 128         # module default num_hidden (already lane-dense)
    OUT = 2         # action logits

    x = jax.random.normal(k_x, (B, IN), jnp.float32)
    w1, b1 = _torch_like_linear_init(k_l1, IN, H)
    w2, b2 = _torch_like_linear_init(k_l2, H, OUT)

    # Prepare (pad + bf16-cast) the weights once, as a training loop would.
    params, out_dim = prepare_policy_params(w1, b1, w2, b2)

    # min_grid_steps=2 -> grid of 2 batch blocks so the parallel/pipelined path runs.
    out = policy_network_forward_prepared(x, params, out_dim, block_b=1024,
                                          min_grid_steps=2)
    out = jax.block_until_ready(out)

    ref = reference_forward(x, w1, b1, w2, b2)
    assert out.shape == (B, OUT)
    err = float(jnp.max(jnp.abs(out - ref)))
    # bf16 MXU inputs -> relaxed tolerance vs the pure-f32 reference.
    assert jnp.allclose(out, ref, atol=2e-2, rtol=2e-2), f"max abs err = {err}"

    # Ragged-batch path (B % TB != 0) exercises the jnp.pad branch.
    B2 = 37
    x2 = jax.random.normal(jax.random.PRNGKey(1), (B2, IN), jnp.float32)
    out2 = jax.block_until_ready(
        policy_network_forward_prepared(x2, params, out_dim, block_b=1024,
                                        min_grid_steps=2))
    ref2 = reference_forward(x2, w1, b1, w2, b2)
    assert out2.shape == (B2, OUT)
    err2 = float(jnp.max(jnp.abs(out2 - ref2)))
    assert jnp.allclose(out2, ref2, atol=2e-2, rtol=2e-2), f"max abs err = {err2}"

    print("KERNEL_OK")
</pallas_src>

<mosaic_0001>
module attributes {stable_mosaic.version = 11 : i64} {
  func.func @policy_net_kernel(%arg0: i32, %arg1: memref<32x8xf32, #tpu.memory_space<vmem>>, %arg2: memref<8x128xbf16, #tpu.memory_space<vmem>>, %arg3: memref<1x128xf32, #tpu.memory_space<vmem>>, %arg4: memref<128x8xbf16, #tpu.memory_space<vmem>>, %arg5: memref<1x8xf32, #tpu.memory_space<vmem>>, %arg6: memref<32x8xf32, #tpu.memory_space<vmem>>) attributes {dimension_semantics = [#tpu.dimension_semantics<parallel>], iteration_bounds = array<i64: 2>, scalar_prefetch = 0 : i64, scratch_operands = 0 : i64, tpu.core_type = #tpu.core_type<tc>, window_params = [{transform_indices = @transform_0, window_bounds = array<i64: 32, 8>}, {pipeline_mode = #tpu.pipeline_mode<synchronous>, transform_indices = @transform_1, window_bounds = array<i64: 8, 128>}, {pipeline_mode = #tpu.pipeline_mode<synchronous>, transform_indices = @transform_2, window_bounds = array<i64: 1, 128>}, {pipeline_mode = #tpu.pipeline_mode<synchronous>, transform_indices = @transform_3, window_bounds = array<i64: 128, 8>}, {pipeline_mode = #tpu.pipeline_mode<synchronous>, transform_indices = @transform_4, window_bounds = array<i64: 1, 8>}, {transform_indices = @transform_5, window_bounds = array<i64: 32, 8>}]} {
    %c0 = arith.constant 0 : index
    %c0_0 = arith.constant 0 : index
    %0 = vector.load %arg1[%c0, %c0_0] : memref<32x8xf32, #tpu.memory_space<vmem>>, vector<32x8xf32>
    %1 = arith.truncf %0 : vector<32x8xf32> to vector<32x8xbf16>
    %c0_1 = arith.constant 0 : index
    %c0_2 = arith.constant 0 : index
    %2 = vector.load %arg2[%c0_1, %c0_2] : memref<8x128xbf16, #tpu.memory_space<vmem>>, vector<8x128xbf16>
    %cst = arith.constant dense<0.000000e+00> : vector<32x128xf32>
    %3 = tpu.matmul %1, %2, %cst {dimension_numbers = #tpu.dot_dimension_numbers<[1], [0], [0], [1], [0, 0, 1, 1], [], []>} : vector<32x8xbf16>, vector<8x128xbf16>, vector<32x128xf32> -> vector<32x128xf32>
    %c0_3 = arith.constant 0 : index
    %c0_4 = arith.constant 0 : index
    %4 = vector.load %arg3[%c0_3, %c0_4] : memref<1x128xf32, #tpu.memory_space<vmem>>, vector<1x128xf32>
    %5 = vector.broadcast %4 : vector<1x128xf32> to vector<32x128xf32>
    %6 = arith.addf %3, %5 : vector<32x128xf32>
    %cst_5 = arith.constant 0.000000e+00 : f32
    %7 = vector.broadcast %cst_5 : f32 to vector<32x128xf32>
    %8 = arith.maximumf %6, %7 : vector<32x128xf32>
    %9 = arith.truncf %8 : vector<32x128xf32> to vector<32x128xbf16>
    %c0_6 = arith.constant 0 : index
    %c0_7 = arith.constant 0 : index
    %10 = vector.load %arg4[%c0_6, %c0_7] : memref<128x8xbf16, #tpu.memory_space<vmem>>, vector<128x8xbf16>
    %cst_8 = arith.constant dense<0.000000e+00> : vector<32x8xf32>
    %11 = tpu.matmul %9, %10, %cst_8 {dimension_numbers = #tpu.dot_dimension_numbers<[1], [0], [0], [1], [0, 0, 1, 1], [], []>} : vector<32x128xbf16>, vector<128x8xbf16>, vector<32x8xf32> -> vector<32x8xf32>
    %c0_9 = arith.constant 0 : index
    %c0_10 = arith.constant 0 : index
    %12 = vector.load %arg5[%c0_9, %c0_10] : memref<1x8xf32, #tpu.memory_space<vmem>>, vector<1x8xf32>
    %13 = vector.broadcast %12 : vector<1x8xf32> to vector<32x8xf32>
    %14 = arith.addf %11, %13 : vector<32x8xf32>
    %cst_11 = arith.constant dense<0xFF800000> : vector<32xf32>
    %15 = vector.multi_reduction <maximumf>, %14, %cst_11 [1] : vector<32x8xf32> to vector<32xf32>
    %16 = vector.shape_cast %15 : vector<32xf32> to vector<32x1xf32>
    %17 = vector.broadcast %16 : vector<32x1xf32> to vector<32x8xf32>
    %18 = arith.subf %14, %17 : vector<32x8xf32>
    %19 = math.exp %18 : vector<32x8xf32>
    %cst_12 = arith.constant dense<0.000000e+00> : vector<32xf32>
    %20 = vector.multi_reduction <add>, %19, %cst_12 [1] : vector<32x8xf32> to vector<32xf32>
    %21 = vector.shape_cast %20 : vector<32xf32> to vector<32x1xf32>
    %22 = math.log %21 : vector<32x1xf32>
    %23 = vector.broadcast %22 : vector<32x1xf32> to vector<32x8xf32>
    %24 = arith.subf %18, %23 : vector<32x8xf32>
    %c0_13 = arith.constant 0 : index
    %c0_14 = arith.constant 0 : index
    %25 = vector.load %arg6[%c0_13, %c0_14] : memref<32x8xf32, #tpu.memory_space<vmem>>, vector<32x8xf32>
    tpu.vector_store %arg6[%c0_13, %c0_14], %24 {strides = array<i32>} : memref<32x8xf32, #tpu.memory_space<vmem>>, vector<32x8xf32>,
    return
  }
  func.func @transform_0(%arg0: i32) -> (i32, i32) {
    %c0_i32 = arith.constant 0 : i32
    %c0_i32_0 = arith.constant 0 : i32
    return %arg0, %c0_i32 : i32, i32
  }
  func.func @transform_1(%arg0: i32) -> (i32, i32) {
    %c0_i32 = arith.constant 0 : i32
    %c0_i32_0 = arith.constant 0 : i32
    %c0_i32_1 = arith.constant 0 : i32
    return %c0_i32, %c0_i32_0 : i32, i32
  }
  func.func @transform_2(%arg0: i32) -> (i32, i32) {
    %c0_i32 = arith.constant 0 : i32
    %c0_i32_0 = arith.constant 0 : i32
    %c0_i32_1 = arith.constant 0 : i32
    return %c0_i32, %c0_i32_0 : i32, i32
  }
  func.func @transform_3(%arg0: i32) -> (i32, i32) {
    %c0_i32 = arith.constant 0 : i32
    %c0_i32_0 = arith.constant 0 : i32
    %c0_i32_1 = arith.constant 0 : i32
    return %c0_i32, %c0_i32_0 : i32, i32
  }
  func.func @transform_4(%arg0: i32) -> (i32, i32) {
    %c0_i32 = arith.constant 0 : i32
    %c0_i32_0 = arith.constant 0 : i32
    %c0_i32_1 = arith.constant 0 : i32
    return %c0_i32, %c0_i32_0 : i32, i32
  }
  func.func @transform_5(%arg0: i32) -> (i32, i32) {
    %c0_i32 = arith.constant 0 : i32
    %c0_i32_0 = arith.constant 0 : i32
    return %arg0, %c0_i32 : i32, i32
  }
}

</mosaic_0001>

<llo_original>
// kernel: tpu_custom_call.1
$region0: #{tpu_custom_call.1}
  #allocation0 [shape = 'u32[]', space=smem, size = 0x4, offset = 0x4, fixed_abs, tag = 'smem constant byte address 0x4 - core index']
  #allocation1 [shape = 'u32[144,128]{1,0:T(1,128)}', space=vmem, size = 0x12000, scoped, tag = 'internal scratch']
  %s0 = inlined_call_operand.vmem [shape: f32[64,8], index: 0, kind: input, shape index: {}]
  %s1 = inlined_call_operand.vmem [shape: bf16[8,128], index: 1, kind: input, shape index: {}]
  %s2 = inlined_call_operand.vmem [shape: f32[1,128], index: 2, kind: input, shape index: {}]
  %s3 = inlined_call_operand.vmem [shape: bf16[128,8], index: 3, kind: input, shape index: {}]
  %s4 = inlined_call_operand.vmem [shape: f32[1,8], index: 4, kind: input, shape index: {}]
  %s5 = inlined_call_operand.vmem [shape: f32[64,8], index: 5, kind: output, shape index: {}]
  %s6 = sld [smem:[#allocation0]]
  $region53: #{tpu_custom_call.1} parent=0
    _
  %s8 = ssub.s32 1, %s6
  %s9 = scalar_select 0, %s8, %s6
  loop: start=0, step=1, limit=4
  $region2: #{tpu_custom_call.1} parent=0 // loop_pre_header
    _
  $region3: #{tpu_custom_call.1} parent=0 // loop_header
    %s11 = sphi 0, %s15
    %p12 = scmp.ge.s32.totalorder %s11, 4
    %s21 = sphi 0, %s23
    %s24 = sphi 0, %s21
    %s25 = sphi 0, %s24
    %s41 = sphi 0, %s25
    %s45 = sphi 0, %s45
    %s47 = sphi 0, %s45
    %s48 = sphi 0, %s47
    %s62 = sphi 0, %s48
    %s66 = sphi 0, %s66
    %s68 = sphi 0, %s66
    %s69 = sphi 0, %s68
    %s83 = sphi 0, %s69
    %s87 = sphi 0, %s87
    %s89 = sphi 0, %s87
    %s90 = sphi 0, %s89
    %s104 = sphi 0, %s90
    %s108 = sphi 0, %s108
    %s110 = sphi 0, %s108
    %s111 = sphi 0, %s110
    %s125 = sphi 0, %s111
    %s131 = sphi 0, %s133
    %s134 = sphi 0, %s131
    %s135 = sphi 0, %s134
    %s151 = sphi 0, %s135
  $region4: #{tpu_custom_call.1} parent=0 // loop_header_branch
    %14 = sbr.rel (%p12) target = $region8
  $region5: #{tpu_custom_call.1} parent=0 // loop_body
    %s16 = ssub.s32 %s11, 1
    %s17 = ssub.s32 %s11, 2
    %s18 = sadd.s32 %s11, 1
    %s19 = ssub.s32 %s11, %s18
    %p20 = scmp.eq.s32.totalorder %s19, 0
    %s22 = sadd.s32 %s21, 1
    %s23 = scalar_select %p20, %s21, %s22
    %p26 = pneg %p20
    %p27 = scmp.eq.s32.totalorder %s11, 1
    %p28 = por %p26, %p27
    %p29 = scmp.ne.s32.totalorder %s21, %s24
    %p30 = scmp.eq.s32.totalorder %s11, 0
    %p31 = por %p29, %p30
    %p32 = scmp.ne.s32.totalorder %s21, %s24
    %p33 = scmp.eq.s32.totalorder %s16, 1
    %p34 = por %p32, %p33
    %p35 = scmp.ne.s32.totalorder %s24, %s25
    %p36 = scmp.eq.s32.totalorder %s16, 0
    %p37 = por %p35, %p36
    %p38 = scmp.ne.s32.totalorder %s24, %s25
    %p39 = scmp.eq.s32.totalorder %s17, 1
    %p40 = por %p38, %p39
    %p42 = scmp.ne.s32.totalorder %s25, %s41
    %p43 = scmp.eq.s32.totalorder %s17, 0
    %p44 = por %p42, %p43
    %s46 = sadd.s32 %s45, 1
    %p49 = scmp.eq.s32.totalorder %s11, 1
    %p50 = scmp.ne.s32.totalorder %s45, %s47
    %p51 = scmp.eq.s32.totalorder %s11, 0
    %p52 = por %p50, %p51
    %p53 = scmp.ne.s32.totalorder %s45, %s47
    %p54 = scmp.eq.s32.totalorder %s16, 1
    %p55 = por %p53, %p54
    %p56 = scmp.ne.s32.totalorder %s47, %s48
    %p57 = scmp.eq.s32.totalorder %s16, 0
    %p58 = por %p56, %p57
    %p59 = scmp.ne.s32.totalorder %s47, %s48
    %p60 = scmp.eq.s32.totalorder %s17, 1
    %p61 = por %p59, %p60
    %p63 = scmp.ne.s32.totalorder %s48, %s62
    %p64 = scmp.eq.s32.totalorder %s17, 0
    %p65 = por %p63, %p64
    %s67 = sadd.s32 %s66, 1
    %p70 = scmp.eq.s32.totalorder %s11, 1
    %p71 = scmp.ne.s32.totalorder %s66, %s68
    %p72 = scmp.eq.s32.totalorder %s11, 0
    %p73 = por %p71, %p72
    %p74 = scmp.ne.s32.totalorder %s66, %s68
    %p75 = scmp.eq.s32.totalorder %s16, 1
    %p76 = por %p74, %p75
    %p77 = scmp.ne.s32.totalorder %s68, %s69
    %p78 = scmp.eq.s32.totalorder %s16, 0
    %p79 = por %p77, %p78
    %p80 = scmp.ne.s32.totalorder %s68, %s69
    %p81 = scmp.eq.s32.totalorder %s17, 1
    %p82 = por %p80, %p81
    %p84 = scmp.ne.s32.totalorder %s69, %s83
    %p85 = scmp.eq.s32.totalorder %s17, 0
    %p86 = por %p84, %p85
    %s88 = sadd.s32 %s87, 1
    %p91 = scmp.eq.s32.totalorder %s11, 1
    %p92 = scmp.ne.s32.totalorder %s87, %s89
    %p93 = scmp.eq.s32.totalorder %s11, 0
    %p94 = por %p92, %p93
    %p95 = scmp.ne.s32.totalorder %s87, %s89
    %p96 = scmp.eq.s32.totalorder %s16, 1
    %p97 = por %p95, %p96
    %p98 = scmp.ne.s32.totalorder %s89, %s90
    %p99 = scmp.eq.s32.totalorder %s16, 0
    %p100 = por %p98, %p99
    %p101 = scmp.ne.s32.totalorder %s89, %s90
    %p102 = scmp.eq.s32.totalorder %s17, 1
    %p103 = por %p101, %p102
    %p105 = scmp.ne.s32.totalorder %s90, %s104
    %p106 = scmp.eq.s32.totalorder %s17, 0
    %p107 = por %p105, %p106
    %s109 = sadd.s32 %s108, 1
    %p112 = scmp.eq.s32.totalorder %s11, 1
    %p113 = scmp.ne.s32.totalorder %s108, %s110
    %p114 = scmp.eq.s32.totalorder %s11, 0
    %p115 = por %p113, %p114
    %p116 = scmp.ne.s32.totalorder %s108, %s110
    %p117 = scmp.eq.s32.totalorder %s16, 1
    %p118 = por %p116, %p117
    %p119 = scmp.ne.s32.totalorder %s110, %s111
    %p120 = scmp.eq.s32.totalorder %s16, 0
    %p121 = por %p119, %p120
    %p122 = scmp.ne.s32.totalorder %s110, %s111
    %p123 = scmp.eq.s32.totalorder %s17, 1
    %p124 = por %p122, %p123
    %p126 = scmp.ne.s32.totalorder %s111, %s125
    %p127 = scmp.eq.s32.totalorder %s17, 0
    %p128 = por %p126, %p127
    %s129 = ssub.s32 %s11, %s18
    %p130 = scmp.eq.s32.totalorder %s129, 0
    %s132 = sadd.s32 %s131, 1
    %s133 = scalar_select %p130, %s131, %s132
    %p136 = pneg %p130
    %p137 = scmp.eq.s32.totalorder %s11, 1
    %p138 = por %p136, %p137
    %p139 = scmp.ne.s32.totalorder %s131, %s134
    %p140 = scmp.eq.s32.totalorder %s11, 0
    %p141 = por %p139, %p140
    %p142 = scmp.ne.s32.totalorder %s131, %s134
    %p143 = scmp.eq.s32.totalorder %s16, 1
    %p144 = por %p142, %p143
    %p145 = scmp.ne.s32.totalorder %s134, %s135
    %p146 = scmp.eq.s32.totalorder %s16, 0
    %p147 = por %p145, %p146
    %p148 = scmp.ne.s32.totalorder %s134, %s135
    %p149 = scmp.eq.s32.totalorder %s17, 1
    %p150 = por %p148, %p149
    %p152 = scmp.ne.s32.totalorder %s135, %s151
    %p153 = scmp.eq.s32.totalorder %s17, 0
    %p154 = por %p152, %p153
    %p155 = scmp.le.s32.totalorder 1, %s11
    %p156 = scmp.lt.s32.totalorder %s11, 3
    %p157 = pnand %p155, %p156
    %p158 = pneg %p157
    // Predicated region
    $region9: #{tpu_custom_call.1} parent=5 // pred_check
      _
    $region10: #{tpu_custom_call.1} parent=5 // pred_check_branch
      %160 = sbr.rel (%p157) target = $region12
    $region11: #{tpu_custom_call.1} parent=5 // pred_region
      %s161 = ssub.s32 %s11, 1
      // Predicated region
      $region13: #{tpu_custom_call.1} parent=11 // pred_check
        %p162 = pneg %p58
      $region14: #{tpu_custom_call.1} parent=11 // pred_check_branch
        %164 = sbr.rel (%p162) target = $region16
      $region15: #{tpu_custom_call.1} parent=11 // pred_region
        _
      $region16: #{tpu_custom_call.1} parent=11 // pred_fallthru
        _
      // Predicated region
      $region17: #{tpu_custom_call.1} parent=11 // pred_check
        %p165 = pneg %p79
      $region18: #{tpu_custom_call.1} parent=11 // pred_check_branch
        %167 = sbr.rel (%p165) target = $region20
      $region19: #{tpu_custom_call.1} parent=11 // pred_region
        _
      $region20: #{tpu_custom_call.1} parent=11 // pred_fallthru
        _
      // Predicated region
      $region21: #{tpu_custom_call.1} parent=11 // pred_check
        %p168 = pneg %p100
      $region22: #{tpu_custom_call.1} parent=11 // pred_check_branch
        %170 = sbr.rel (%p168) target = $region24
      $region23: #{tpu_custom_call.1} parent=11 // pred_region
        _
      $region24: #{tpu_custom_call.1} parent=11 // pred_fallthru
        _
      // Predicated region
      $region25: #{tpu_custom_call.1} parent=11 // pred_check
        %p171 = pneg %p121
      $region26: #{tpu_custom_call.1} parent=11 // pred_check_branch
        %173 = sbr.rel (%p171) target = $region28
      $region27: #{tpu_custom_call.1} parent=11 // pred_region
        _
      $region28: #{tpu_custom_call.1} parent=11 // pred_fallthru
        _
    $region12: #{tpu_custom_call.1} parent=5 // pred_fallthru
      _
    %p174 = scmp.lt.s32.totalorder %s11, 2
    // Predicated region
    $region29: #{tpu_custom_call.1} parent=5 // pred_check
      %p175 = pneg %p174
    $region30: #{tpu_custom_call.1} parent=5 // pred_check_branch
      %177 = sbr.rel (%p175) target = $region32
    $region31: #{tpu_custom_call.1} parent=5 // pred_region
      // Predicated region
      $region33: #{tpu_custom_call.1} parent=31 // pred_check
        %p178 = pneg %p31
      $region34: #{tpu_custom_call.1} parent=31 // pred_check_branch
        %180 = sbr.rel (%p178) target = $region36
      $region35: #{tpu_custom_call.1} parent=31 // pred_region
        %s181 = smul.u32 4, %s11
        %p182 = scmp.lt.s32.totalorder %s181, 7
        %s183 = scalar_select %p182, %s181, 7
        %s184 = smul.addr %s183, 8
        %s185 = scalar_lea.vmem %s0, %s184
        %s186 = smul.u32 4, %s11
      $region36: #{tpu_custom_call.1} parent=31 // pred_fallthru
        _
    $region32: #{tpu_custom_call.1} parent=5 // pred_fallthru
      _
    %p187 = scmp.le.s32.totalorder 1, %s11
    %p188 = scmp.lt.s32.totalorder %s11, 3
    %p189 = pnand %p187, %p188
    %p190 = pneg %p189
    // Predicated region
    $region37: #{tpu_custom_call.1} parent=5 // pred_check
      _
    $region38: #{tpu_custom_call.1} parent=5 // pred_check_branch
      %192 = sbr.rel (%p189) target = $region40
    $region39: #{tpu_custom_call.1} parent=5 // pred_region
      %s193 = ssub.s32 %s11, 1
      %s194 = smul.u32 4, %s16
      %p195 = scmp.lt.s32.totalorder %s194, 7
      %s196 = scalar_select %p195, %s194, 7
      %s197 = smul.addr %s196, 8
      %s198 = scalar_lea.vmem %s0, %s197
      %p199 = pneg %p37
      %p200 = pneg %p34
      %p201 = pneg %p58
      %p202 = pneg %p55
      %p203 = pneg %p79
      %p204 = pneg %p76
      %p205 = pneg %p100
      %p206 = pneg %p97
      %p207 = pneg %p121
      %p208 = pneg %p118
      %p209 = pneg %p147
      %p210 = pneg %p144
      %s211 = smul.u32 4, %s16
      %p212 = scmp.lt.s32.totalorder %s211, 7
      %s213 = scalar_select %p212, %s211, 7
      %s214 = smul.addr %s213, 8
      %s215 = scalar_lea.vmem %s5, %s214
      %s216 = smul.u32 4, %s16
      %p217 = scmp.lt.s32.totalorder %s216, 7
      %s218 = scalar_select %p217, %s216, 7
      %s219 = smul.addr %s218, 8
      %s220 = scalar_lea.vmem %s0, %s219
      %s221 = smul.u32 4, %s16
      %s222 = smul.u32 4, %s16
      %p223 = scmp.lt.s32.totalorder %s222, 7
      %s224 = scalar_select %p223, %s222, 7
      %s225 = smul.addr %s224, 8
      %s226 = scalar_lea.vmem %s5, %s225
      %s227 = smul.u32 4, %s16
      %v229 = vld [vmem:[%s220] sm:$0xff]
      %v230 = vld [vmem:[%s220 + $0x8] sm:$0xff]
      %v231 = vld [vmem:[%s220 + $0x10] sm:$0xff]
      %v232 = vld [vmem:[%s220 + $0x18] sm:$0xff]
      %v233 = vpack.c.bf16 %v230, %v229
      %v234 = vpack.c.bf16 %v232, %v231
      %v235 = vld [vmem:[%s1] sm:$0xf]
      %v236 = vld [vmem:[%s2] sm:$0x1]
      %v238 = vlaneseq
      %v239 = vshrl.u32 %v238, 7
      %v240 = vsub.s32 0, %v239
      %v241 = vrot.slane %v236, %v240
      %vm243 = vcmask 64512
      %v245 = vsel %vm243, %v233, 0
      %v248 = vsel %vm243, %v234, 0
      %vm250 = vcmask 1043456
      %v252 = vsel %vm250, %v235, 0
      %254 = vmatprep.subr.bf16.mxu0 0
      %255 = vmatpush1.bf16.msra.mxu0 0
      %256 = vmatprep.subr.bf16.mxu0 0
      %257 = vmatpush1.bf16.msra.mxu0 0
      %258 = vmatprep.subr.bf16.mxu0 0
      %259 = vmatpush1.bf16.msra.mxu0 0
      %260 = vmatprep.subr.bf16.mxu0 0
      %261 = vmatpush1.bf16.msra.mxu0 0
      %262 = vmatprep.subr.bf16.mxu0 0
      %263 = vmatpush1.bf16.msra.mxu0 0
      %264 = vmatprep.subr.bf16.mxu0 0
      %265 = vmatpush1.bf16.msra.mxu0 0
      %266 = vmatprep.subr.bf16.mxu0 0
      %267 = vmatpush1.bf16.msra.mxu0 0
      %268 = vmatprep.subr.bf16.mxu0 0
      %269 = vmatpush1.bf16.msra.mxu0 %v252
      %270 = vmatprep.subr.bf16.mxu0 0
      %271 = vmatpush2.bf16.msra.mxu0 0
      %272 = vmatprep.subr.bf16.mxu0 0
      %273 = vmatpush2.bf16.msra.mxu0 0
      %274 = vmatprep.subr.bf16.mxu0 0
      %275 = vmatpush2.bf16.msra.mxu0 0
      %276 = vmatprep.subr.bf16.mxu0 0
      %277 = vmatpush2.bf16.msra.mxu0 0
      %278 = vmatprep.subr.bf16.mxu0 0
      %279 = vmatpush2.bf16.msra.mxu0 0
      %280 = vmatprep.subr.bf16.mxu0 0
      %281 = vmatpush2.bf16.msra.mxu0 0
      %282 = vmatprep.subr.bf16.mxu0 0
      %283 = vmatpush2.bf16.msra.mxu0 0
      %284 = vmatprep.subr.bf16.mxu0 0
      %285 = vmatpush2.bf16.msra.mxu0 0
      %286 = vmatprep.mubr.bf16.mxu0 0
      %287 = vmatmul.mubr.bf16.gmra.mxu0 %v245
      %v288 = vpop.f32.mrf.mxu0
      %v289 = vadd.f32 %v241, %v288
      %v290 = vpop.f32.mrf.mxu0
      %v291 = vpop.f32.mrf.mxu0
      %v292 = vadd.f32 %v241, %v291
      %v293 = vpop.f32.mrf.mxu0
      %294 = vmatprep.mubr.bf16.mxu0 0
      %295 = vmatmul.mubr.bf16.gmra.mxu0 %v248
      %v296 = vpop.f32.mrf.mxu0
      %v297 = vadd.f32 %v241, %v296
      %v298 = vpop.f32.mrf.mxu0
      %v299 = vpop.f32.mrf.mxu0
      %v300 = vadd.f32 %v241, %v299
      %v301 = vpop.f32.mrf.mxu0
      %302 = vdwg.mxu0
      %v303 = vmax.f32 %v289, 0.0
      %v304 = vmax.f32 %v292, 0.0
      %v305 = vmax.f32 %v297, 0.0
      %v306 = vmax.f32 %v300, 0.0
      %v307 = vpack.c.bf16 %v304, %v303
      %v308 = vpack.c.bf16 %v306, %v305
      %v309 = vld [vmem:[%s3] sm:$0xf]
      %v310 = vld [vmem:[%s3 + $0x4] sm:$0xf]
      %v311 = vld [vmem:[%s3 + $0x8] sm:$0xf]
      %v312 = vld [vmem:[%s3 + $0xc] sm:$0xf]
      %v313 = vld [vmem:[%s3 + $0x10] sm:$0xf]
      %v314 = vld [vmem:[%s3 + $0x14] sm:$0xf]
      %v315 = vld [vmem:[%s3 + $0x18] sm:$0xf]
      %v316 = vld [vmem:[%s3 + $0x1c] sm:$0xf]
      %v317 = vld [vmem:[%s3 + $0x20] sm:$0xf]
      %v318 = vld [vmem:[%s3 + $0x24] sm:$0xf]
      %v319 = vld [vmem:[%s3 + $0x28] sm:$0xf]
      %v320 = vld [vmem:[%s3 + $0x2c] sm:$0xf]
      %v321 = vld [vmem:[%s3 + $0x30] sm:$0xf]
      %v322 = vld [vmem:[%s3 + $0x34] sm:$0xf]
      %v323 = vld [vmem:[%s3 + $0x38] sm:$0xf]
      %v324 = vld [vmem:[%s3 + $0x3c] sm:$0xf]
      %v325 = vld [vmem:[%s4] sm:$0x1]
      %v327 = vlaneseq
      %v328 = vshrl.u32 %v327, 7
      %v329 = vsub.s32 0, %v328
      %v330 = vrot.slane %v325, %v329
      %v348 = vunpack.c.l.b16 %v309
      %v349 = vunpack.c.l.b16 %v310
      %v350 = vunpack.c.l.b16 %v311
      %v351 = vunpack.c.l.b16 %v312
      %v352 = vunpack.c.l.b16 %v313
      %v353 = vunpack.c.l.b16 %v314
      %v354 = vunpack.c.l.b16 %v315
      %v355 = vunpack.c.l.b16 %v316
      %v356 = vunpack.c.l.b16 %v317
      %v357 = vunpack.c.l.b16 %v318
      %v358 = vunpack.c.l.b16 %v319
      %v359 = vunpack.c.l.b16 %v320
      %v360 = vunpack.c.l.b16 %v321
      %v361 = vunpack.c.l.b16 %v322
      %v362 = vunpack.c.l.b16 %v323
      %v363 = vunpack.c.l.b16 %v324
      %v364 = vpack.c.b16 %v349, %v348
      %v365 = vpack.c.b16 %v351, %v350
      %v366 = vpack.c.b16 %v353, %v352
      %v367 = vpack.c.b16 %v355, %v354
      %v368 = vpack.c.b16 %v357, %v356
      %v369 = vpack.c.b16 %v359, %v358
      %v370 = vpack.c.b16 %v361, %v360
      %v371 = vpack.c.b16 %v363, %v362
      %380 = vmatprep.subr.bf16.mxu0 0
      %381 = vmatpush1.bf16.msra.mxu0 %v371
      %382 = vmatprep.subr.bf16.mxu0 0
      %383 = vmatpush1.bf16.msra.mxu0 %v370
      %384 = vmatprep.subr.bf16.mxu0 0
      %385 = vmatpush1.bf16.msra.mxu0 %v369
      %386 = vmatprep.subr.bf16.mxu0 0
      %387 = vmatpush1.bf16.msra.mxu0 %v368
      %388 = vmatprep.subr.bf16.mxu0 0
      %389 = vmatpush1.bf16.msra.mxu0 %v367
      %390 = vmatprep.subr.bf16.mxu0 0
      %391 = vmatpush1.bf16.msra.mxu0 %v366
      %392 = vmatprep.subr.bf16.mxu0 0
      %393 = vmatpush1.bf16.msra.mxu0 %v365
      %394 = vmatprep.subr.bf16.mxu0 0
      %395 = vmatpush1.bf16.msra.mxu0 %v364
      %396 = vmatprep.subr.bf16.mxu0 0
      %397 = vmatpush2.bf16.msra.mxu0 0
      %398 = vmatprep.subr.bf16.mxu0 0
      %399 = vmatpush2.bf16.msra.mxu0 0
      %400 = vmatprep.subr.bf16.mxu0 0
      %401 = vmatpush2.bf16.msra.mxu0 0
      %402 = vmatprep.subr.bf16.mxu0 0
      %403 = vmatpush2.bf16.msra.mxu0 0
      %404 = vmatprep.subr.bf16.mxu0 0
      %405 = vmatpush2.bf16.msra.mxu0 0
      %406 = vmatprep.subr.bf16.mxu0 0
      %407 = vmatpush2.bf16.msra.mxu0 0
      %408 = vmatprep.subr.bf16.mxu0 0
      %409 = vmatpush2.bf16.msra.mxu0 0
      %410 = vmatprep.subr.bf16.mxu0 0
      %411 = vmatpush2.bf16.msra.mxu0 0
      %412 = vmatprep.mubr.bf16.mxu0 0
      %413 = vmatmul.mubr.bf16.gmra.mxu0 %v307
      %v414 = vpop.f32.mrf.mxu0
      %v415 = vadd.f32 %v330, %v414
      %v416 = vpop.f32.mrf.mxu0
      %v417 = vpop.f32.mrf.mxu0
      %v418 = vadd.f32 %v330, %v417
      %v419 = vpop.f32.mrf.mxu0
      %420 = vmatprep.mubr.bf16.mxu0 0
      %421 = vmatmul.mubr.bf16.gmra.mxu0 %v308
      %v422 = vpop.f32.mrf.mxu0
      %v423 = vadd.f32 %v330, %v422
      %v424 = vpop.f32.mrf.mxu0
      %v425 = vpop.f32.mrf.mxu0
      %v426 = vadd.f32 %v330, %v425
      %v427 = vpop.f32.mrf.mxu0
      %428 = vdwg.mxu0
      %v429 = vsel %vm243, %v415, -inf
      %430 = vmax.xlane.f32.xlu0 %v429
      %v431 = vpop.xlane.xlu0 %430
      %v432 = vsel %vm243, %v418, -inf
      %433 = vmax.xlane.f32.xlu0 %v432
      %v434 = vpop.xlane.xlu0 %433
      %v435 = vsel %vm243, %v423, -inf
      %436 = vmax.xlane.f32.xlu0 %v435
      %v437 = vpop.xlane.xlu0 %436
      %v438 = vsel %vm243, %v426, -inf
      %439 = vmax.xlane.f32.xlu0 %v438
      %v440 = vpop.xlane.xlu0 %439
      %v441 = vsub.f32 %v415, %v431
      %v442 = vsub.f32 %v418, %v434
      %v443 = vsub.f32 %v423, %v437
      %v444 = vsub.f32 %v426, %v440
      %v445 = vmul.f32 %v441, 1.442695
      %v446 = vpow.pop %v445
      %v447 = vmul.f32 %v442, 1.442695
      %v448 = vpow.pop %v447
      %v449 = vmul.f32 %v443, 1.442695
      %v450 = vpow.pop %v449
      %v451 = vmul.f32 %v444, 1.442695
      %v452 = vpow.pop %v451
      %v453 = vsel %vm243, %v446, 0.0
      %454 = vadd.xlane.f32.xlu0 %v453
      %v455 = vpop.xlane.xlu0 %454
      %v456 = vsel %vm243, %v448, 0.0
      %457 = vadd.xlane.f32.xlu0 %v456
      %v458 = vpop.xlane.xlu0 %457
      %v459 = vsel %vm243, %v450, 0.0
      %460 = vadd.xlane.f32.xlu0 %v459
      %v461 = vpop.xlane.xlu0 %460
      %v462 = vsel %vm243, %v452, 0.0
      %463 = vadd.xlane.f32.xlu0 %v462
      %v464 = vpop.xlane.xlu0 %463
      %v465 = vlog2.pop %v455
      %v466 = vmul.f32 %v465, 0.6931472
      %v467 = vlog2.pop %v458
      %v468 = vmul.f32 %v467, 0.6931472
      %v469 = vlog2.pop %v461
      %v470 = vmul.f32 %v469, 0.6931472
      %v471 = vlog2.pop %v464
      %v472 = vmul.f32 %v471, 0.6931472
      %v473 = vsub.f32 %v441, %v466
      %v474 = vsub.f32 %v442, %v468
      %v475 = vsub.f32 %v443, %v470
      %v476 = vsub.f32 %v444, %v472
      %477 = vst.msk [vmem:[%s226] sm:$0xff] %vm243, %v473
      %478 = vst.msk [vmem:[%s226 + $0x8] sm:$0xff] %vm243, %v474
      %479 = vst.msk [vmem:[%s226 + $0x10] sm:$0xff] %vm243, %v475
      %480 = vst.msk [vmem:[%s226 + $0x18] sm:$0xff] %vm243, %v476
      %s481 = smul.u32 4, %s16
      %p482 = scmp.lt.s32.totalorder %s481, 7
      %s483 = scalar_select %p482, %s481, 7
      %s484 = smul.addr %s483, 8
      %s485 = scalar_lea.vmem %s5, %s484
      // Predicated region
      $region41: #{tpu_custom_call.1} parent=39 // pred_check
        %p486 = pneg %p144
      $region42: #{tpu_custom_call.1} parent=39 // pred_check_branch
        %488 = sbr.rel (%p486) target = $region44
      $region43: #{tpu_custom_call.1} parent=39 // pred_region
        %s489 = smul.u32 4, %s16
      $region44: #{tpu_custom_call.1} parent=39 // pred_fallthru
        _
    $region40: #{tpu_custom_call.1} parent=5 // pred_fallthru
      _
    %p490 = scmp.le.s32.totalorder 2, %s11
    // Predicated region
    $region45: #{tpu_custom_call.1} parent=5 // pred_check
      %p491 = pneg %p490
    $region46: #{tpu_custom_call.1} parent=5 // pred_check_branch
      %493 = sbr.rel (%p491) target = $region48
    $region47: #{tpu_custom_call.1} parent=5 // pred_region
      %s494 = ssub.s32 %s11, 2
      // Predicated region
      $region49: #{tpu_custom_call.1} parent=47 // pred_check
        %p495 = pneg %p150
      $region50: #{tpu_custom_call.1} parent=47 // pred_check_branch
        %497 = sbr.rel (%p495) target = $region52
      $region51: #{tpu_custom_call.1} parent=47 // pred_region
        %s498 = smul.u32 4, %s17
        %p499 = scmp.lt.s32.totalorder %s498, 7
        %s500 = scalar_select %p499, %s498, 7
        %s501 = smul.addr %s500, 8
        %s502 = scalar_lea.vmem %s5, %s501
      $region52: #{tpu_custom_call.1} parent=47 // pred_fallthru
        _
    $region48: #{tpu_custom_call.1} parent=5 // pred_fallthru
      _
  $region6: #{tpu_custom_call.1} parent=0 // loop_footer
    %s15 = sadd.s32 1, %s11
  $region7: #{tpu_custom_call.1} parent=0 // loop_footer_branch
    %10 = sbr.rel target = $region3
  $region8: #{tpu_custom_call.1} parent=0 // loop_exit
    _

</llo_original>
